<compile_context>
chip_gen: v7x
topology: tpu7x:2x2x1
jax: 0.10.0
libtpu: 0.0.40
codegen_flags: <defaults>
</compile_context>

<pallas_src>
import functools

import jax
import jax.numpy as jnp
from jax.experimental import pallas as pl
from jax.experimental.pallas import tpu as pltpu


# ----------------------------- Pallas kernel ----------------------------------

def _fused_ngcn_kernel(x_ref, w_ref, b_ref, a_ref, o_ref, h_ref, *, iterations, n_valid):
    """One output-channel block of the whole SparseNGCNLayer forward.

    o = A^(iterations-1) @ relu(X @ W_blk + b_blk)     (dropout == identity in eval mode)

    `iterations` and `n_valid` are static Python ints: the propagation loop is unrolled at
    trace time and H never leaves VMEM between steps.  H ping-pongs between o_ref and the
    single VMEM scratch so at most two H buffers are ever live; the buffer order is chosen
    so the final propagation writes o_ref directly.
    """
    # Projection + bias + ReLU (f32).
    h = jnp.dot(x_ref[...], w_ref[...], preferred_element_type=jnp.float32)
    h = jnp.maximum(h + b_ref[...], 0.0)

    # Padded X rows are zero, but the bias broadcast leaves relu(b) in padded H rows.
    # Zero them so padded rows stay exactly zero through the propagation chain.
    if n_valid < h.shape[0]:
        row_ids = jax.lax.broadcasted_iota(jnp.int32, h.shape, 0)
        h = jnp.where(row_ids < n_valid, h, 0.0)

    n_prop = iterations - 1
    bufs = (o_ref, h_ref) if n_prop % 2 == 0 else (h_ref, o_ref)
    bufs[0][...] = h.astype(bufs[0].dtype)
    for step in range(n_prop):
        src = bufs[step % 2]
        dst = bufs[(step + 1) % 2]
        # bf16 MXU inputs (A is already bf16; cast H), f32 accumulation.
        dst[...] = jnp.dot(
            a_ref[...], src[...].astype(a_ref.dtype),
            preferred_element_type=jnp.float32,
        ).astype(dst.dtype)


# ------------------------------ wrapper ----------------------------------------

def _round_up(x, m):
    return -(-x // m) * m


def _tpu_vmem_capacity_bytes():
    """Physical VMEM capacity for the current generation (fallback: v7x per-TC 64 MiB)."""
    try:
        return int(pltpu.get_tpu_info().vmem_capacity_bytes)
    except Exception:
        return 64 * 1024 * 1024


def fused_sparse_ngcn(x_pad, w, b, a_pad, n_valid, iterations, *, prop_dtype=jnp.bfloat16):
    """A^(iterations-1) @ relu(x @ w + b), as one Pallas kernel with a channel-parallel grid.

    x_pad:(Np, Kp) f32 lane-padded features; a_pad:(Np, Np) lane-padded adjacency (cast to
    `prop_dtype` here); w:(K, C); b:(1, C).  Returns the (n_valid, C) logical result.
    """
    np_, kp = x_pad.shape
    k, c = w.shape
    assert kp >= k and a_pad.shape == (np_, np_) and b.shape == (1, c)
    cp = _round_up(c, 128)

    # 256-wide output tiles fill the v6e/v7x 2x256x256 MXU result columns (two native passes
    # on v5e's 128x128 MXU, harmless); fall back to 128 when cp isn't a multiple of 256.
    tile_c = 256 if cp % 256 == 0 else 128
    grid = (cp // tile_c,)

    # Small padded params (cheap); A gets only a dtype cast, never a pad pass.
    wp = jnp.pad(w.astype(jnp.float32), ((0, kp - k), (0, cp - c)))
    bp = jnp.pad(b.astype(jnp.float32), ((0, 0), (0, cp - c)))
    ap = a_pad.astype(prop_dtype)

    # Generation-aware VMEM budget (conservative 2x on every pipelined operand + the scratch).
    a_bytes = jnp.dtype(prop_dtype).itemsize
    vmem_est = 2 * (np_ * kp * 4            # X (resident)
                    + kp * tile_c * 4       # W channel block
                    + tile_c * 4            # bias channel block
                    + np_ * np_ * a_bytes   # A (resident, bf16)
                    + np_ * tile_c * 4)     # output channel block
    vmem_est += np_ * tile_c * 4            # H ping-pong scratch
    vmem_limit = int(0.8 * _tpu_vmem_capacity_bytes())   # ~20% headroom for compiler scratch
    assert vmem_est <= vmem_limit, (
        "graph too large for the single-pass fused kernel on this TPU generation; "
        "stream A from HBM instead (see TODO at top of file)")

    flops = 2 * np_ * kp * cp + (iterations - 1) * 2 * np_ * np_ * cp
    bytes_accessed = (np_ * kp * 4 + kp * cp * 4 + cp * 4
                      + np_ * np_ * a_bytes + np_ * cp * 4)

    out = pl.pallas_call(
        functools.partial(_fused_ngcn_kernel, iterations=iterations, n_valid=n_valid),
        out_shape=jax.ShapeDtypeStruct((np_, cp), jnp.float32),
        grid=grid,
        in_specs=[
            pl.BlockSpec((np_, kp), lambda j: (0, 0)),       # X: resident across the grid
            pl.BlockSpec((kp, tile_c), lambda j: (0, j)),    # W: streams per channel block
            pl.BlockSpec((1, tile_c), lambda j: (0, j)),     # b: streams per channel block
            pl.BlockSpec((np_, np_), lambda j: (0, 0)),      # A: resident across the grid
        ],
        out_specs=pl.BlockSpec((np_, tile_c), lambda j: (0, j)),
        scratch_shapes=[pltpu.VMEM((np_, tile_c), jnp.float32)],   # H ping-pong buffer
        compiler_params=pltpu.CompilerParams(
            dimension_semantics=("parallel",),               # megacore split on v7x
            vmem_limit_bytes=vmem_limit),
        cost_estimate=pl.CostEstimate(
            flops=flops, transcendentals=0, bytes_accessed=bytes_accessed),
    )(x_pad, wp, bp, ap)

    return out[:n_valid, :c]


# ------------------------- SparseNGCNLayer forward ----------------------------

def coo_to_dense_padded(indices, values, padded_shape, dtype=jnp.float32):
    """Densify a COO matrix straight into a lane-padded buffer.

    Scatter-add matches torch spmm duplicate handling; scattering directly into the padded
    shape avoids a separate jnp.pad pass over the full (largest) operand in HBM.
    """
    rows, cols = indices
    return jnp.zeros(padded_shape, dtype).at[rows, cols].add(values.astype(dtype))


def sparse_ngcn_forward(adj_coo, feat_coo, weight, bias, iterations):
    # feature_count = max(indices, dim=1) + 1  -> dense feature matrix shape (torch semantics).
    # NOTE: int(...) is demo glue (host sync); not part of the kernel hot path.
    feat_rows = int(jnp.max(feat_coo[0][0])) + 1
    feat_cols = int(jnp.max(feat_coo[0][1])) + 1

    np_ = _round_up(feat_rows, 128)
    kp = _round_up(feat_cols, 128)

    # Densify directly into padded buffers (no jnp.pad pass, zero padding is exact for matmul).
    x_pad = coo_to_dense_padded(feat_coo[0], feat_coo[1], (np_, kp))
    a_pad = coo_to_dense_padded(adj_coo[0], adj_coo[1], (np_, np_))

    # Entire forward (projection + bias + relu + propagation) in one pallas_call.
    return fused_sparse_ngcn(x_pad, weight, bias, a_pad, feat_rows, iterations)


# ---------------------------------- main ---------------------------------------

if __name__ == "__main__":
    N_NODES = 120       # graph size (not a multiple of 128 -> exercises row padding/masking)
    C_IN = 60           # in_channels
    C_OUT = 300         # out_channels (pads to 384 -> 3 channel blocks of 128)
    ITERATIONS = 3      # adjacency power order
    DROPOUT = 0.5       # unused in eval mode (dropout == identity)

    key = jax.random.PRNGKey(0)
    k_w, k_b, k_fi, k_fv, k_ai, k_av = jax.random.split(key, 6)

    # Xavier-uniform init (matches torch.nn.init.xavier_uniform_).
    w_bound = (6.0 / (C_IN + C_OUT)) ** 0.5
    weight = jax.random.uniform(k_w, (C_IN, C_OUT), jnp.float32, -w_bound, w_bound)
    b_bound = (6.0 / (C_OUT + 1)) ** 0.5
    bias = jax.random.uniform(k_b, (1, C_OUT), jnp.float32, -b_bound, b_bound)

    # Deterministic sparse (COO) feature matrix; guarantee max indices hit (N-1, C_IN-1)
    # so feature_count == (N_NODES, C_IN) like the torch code derives it.
    nnz_f = 512
    f_rows = jax.random.randint(k_fi, (nnz_f,), 0, N_NODES).at[0].set(N_NODES - 1)
    f_cols = jax.random.randint(jax.random.fold_in(k_fi, 1), (nnz_f,), 0, C_IN).at[0].set(C_IN - 1)
    f_vals = jax.random.uniform(k_fv, (nnz_f,), jnp.float32, 0.1, 1.0)
    feat_coo = ((f_rows, f_cols), f_vals)

    # Deterministic sparse (COO) "normalized adjacency" matrix.
    nnz_a = 1024
    a_rows = jax.random.randint(k_ai, (nnz_a,), 0, N_NODES)
    a_cols = jax.random.randint(jax.random.fold_in(k_ai, 1), (nnz_a,), 0, N_NODES)
    a_vals = jax.random.uniform(k_av, (nnz_a,), jnp.float32, 0.0, 0.2)
    adj_coo = ((a_rows, a_cols), a_vals)

    out = sparse_ngcn_forward(adj_coo, feat_coo, weight, bias, ITERATIONS)
    out = jax.block_until_ready(out)

    # Silent correctness check against a pure-JAX f32 reference of the same math.
    # Tolerances are relaxed for the bf16 A / H propagation feeds (f32 accumulation).
    def coo_to_dense(indices, values, shape):
        rows, cols = indices
        return jnp.zeros(shape, jnp.float32).at[rows, cols].add(values)

    x_d = coo_to_dense(feat_coo[0], feat_coo[1], (N_NODES, C_IN))
    a_d = coo_to_dense(adj_coo[0], adj_coo[1], (N_NODES, N_NODES))
    ref = jnp.maximum(x_d @ weight + bias, 0.0)
    for _ in range(ITERATIONS - 1):
        ref = a_d @ ref
    assert out.shape == (N_NODES, C_OUT)
    assert jnp.allclose(out, ref, atol=2e-2, rtol=2e-2)

    print("KERNEL_OK")
</pallas_src>

<mosaic_0001>
module attributes {stable_mosaic.version = 11 : i64} {
  func.func @_fused_ngcn_kernel(%arg0: i32, %arg1: memref<128x128xf32, #tpu.memory_space<vmem>>, %arg2: memref<128x128xf32, #tpu.memory_space<vmem>>, %arg3: memref<1x128xf32, #tpu.memory_space<vmem>>, %arg4: memref<128x128xbf16, #tpu.memory_space<vmem>>, %arg5: memref<128x128xf32, #tpu.memory_space<vmem>>, %arg6: memref<128x128xf32, #tpu.memory_space<vmem>>) attributes {dimension_semantics = [#tpu.dimension_semantics<parallel>], iteration_bounds = array<i64: 3>, scalar_prefetch = 0 : i64, scratch_operands = 1 : i64, tpu.core_type = #tpu.core_type<tc>, window_params = [{pipeline_mode = #tpu.pipeline_mode<synchronous>, transform_indices = @transform_0, window_bounds = array<i64: 128, 128>}, {transform_indices = @transform_1, window_bounds = array<i64: 128, 128>}, {transform_indices = @transform_2, window_bounds = array<i64: 1, 128>}, {pipeline_mode = #tpu.pipeline_mode<synchronous>, transform_indices = @transform_3, window_bounds = array<i64: 128, 128>}, {transform_indices = @transform_4, window_bounds = array<i64: 128, 128>}]} {
    %c0 = arith.constant 0 : index
    %c0_0 = arith.constant 0 : index
    %0 = vector.load %arg1[%c0, %c0_0] : memref<128x128xf32, #tpu.memory_space<vmem>>, vector<128x128xf32>
    %c0_1 = arith.constant 0 : index
    %c0_2 = arith.constant 0 : index
    %1 = vector.load %arg2[%c0_1, %c0_2] : memref<128x128xf32, #tpu.memory_space<vmem>>, vector<128x128xf32>
    %cst = arith.constant dense<0.000000e+00> : vector<128x128xf32>
    %2 = tpu.matmul %0, %1, %cst {dimension_numbers = #tpu.dot_dimension_numbers<[1], [0], [0], [1], [0, 0, 1, 1], [], []>} : vector<128x128xf32>, vector<128x128xf32>, vector<128x128xf32> -> vector<128x128xf32>
    %c0_3 = arith.constant 0 : index
    %c0_4 = arith.constant 0 : index
    %3 = vector.load %arg3[%c0_3, %c0_4] : memref<1x128xf32, #tpu.memory_space<vmem>>, vector<1x128xf32>
    %4 = vector.broadcast %3 : vector<1x128xf32> to vector<128x128xf32>
    %5 = arith.addf %2, %4 : vector<128x128xf32>
    %cst_5 = arith.constant 0.000000e+00 : f32
    %6 = vector.broadcast %cst_5 : f32 to vector<128x128xf32>
    %7 = arith.maximumf %5, %6 : vector<128x128xf32>
    %8 = tpu.iota {dimensions = array<i32: 0>} : vector<128x128xi32>
    %c120_i32 = arith.constant 120 : i32
    %9 = vector.broadcast %c120_i32 : i32 to vector<128x128xi32>
    %10 = arith.cmpi slt, %8, %9 : vector<128x128xi32>
    %cst_6 = arith.constant 0.000000e+00 : f32
    %11 = vector.broadcast %cst_6 : f32 to vector<128x128xf32>
    %12 = arith.select %10, %7, %11 : vector<128x128xi1>, vector<128x128xf32>
    %c0_7 = arith.constant 0 : index
    %c0_8 = arith.constant 0 : index
    %13 = vector.load %arg5[%c0_7, %c0_8] : memref<128x128xf32, #tpu.memory_space<vmem>>, vector<128x128xf32>
    tpu.vector_store %arg5[%c0_7, %c0_8], %12 {strides = array<i32>} : memref<128x128xf32, #tpu.memory_space<vmem>>, vector<128x128xf32>,
    %c0_9 = arith.constant 0 : index
    %c0_10 = arith.constant 0 : index
    %14 = vector.load %arg4[%c0_9, %c0_10] : memref<128x128xbf16, #tpu.memory_space<vmem>>, vector<128x128xbf16>
    %c0_11 = arith.constant 0 : index
    %c0_12 = arith.constant 0 : index
    %15 = vector.load %arg5[%c0_11, %c0_12] : memref<128x128xf32, #tpu.memory_space<vmem>>, vector<128x128xf32>
    %16 = arith.truncf %15 : vector<128x128xf32> to vector<128x128xbf16>
    %cst_13 = arith.constant dense<0.000000e+00> : vector<128x128xf32>
    %17 = tpu.matmul %14, %16, %cst_13 {dimension_numbers = #tpu.dot_dimension_numbers<[1], [0], [0], [1], [0, 0, 1, 1], [], []>} : vector<128x128xbf16>, vector<128x128xbf16>, vector<128x128xf32> -> vector<128x128xf32>
    %c0_14 = arith.constant 0 : index
    %c0_15 = arith.constant 0 : index
    %18 = vector.load %arg6[%c0_14, %c0_15] : memref<128x128xf32, #tpu.memory_space<vmem>>, vector<128x128xf32>
    tpu.vector_store %arg6[%c0_14, %c0_15], %17 {strides = array<i32>} : memref<128x128xf32, #tpu.memory_space<vmem>>, vector<128x128xf32>,
    %c0_16 = arith.constant 0 : index
    %c0_17 = arith.constant 0 : index
    %19 = vector.load %arg4[%c0_16, %c0_17] : memref<128x128xbf16, #tpu.memory_space<vmem>>, vector<128x128xbf16>
    %c0_18 = arith.constant 0 : index
    %c0_19 = arith.constant 0 : index
    %20 = vector.load %arg6[%c0_18, %c0_19] : memref<128x128xf32, #tpu.memory_space<vmem>>, vector<128x128xf32>
    %21 = arith.truncf %20 : vector<128x128xf32> to vector<128x128xbf16>
    %cst_20 = arith.constant dense<0.000000e+00> : vector<128x128xf32>
    %22 = tpu.matmul %19, %21, %cst_20 {dimension_numbers = #tpu.dot_dimension_numbers<[1], [0], [0], [1], [0, 0, 1, 1], [], []>} : vector<128x128xbf16>, vector<128x128xbf16>, vector<128x128xf32> -> vector<128x128xf32>
    %c0_21 = arith.constant 0 : index
    %c0_22 = arith.constant 0 : index
    %23 = vector.load %arg5[%c0_21, %c0_22] : memref<128x128xf32, #tpu.memory_space<vmem>>, vector<128x128xf32>
    tpu.vector_store %arg5[%c0_21, %c0_22], %22 {strides = array<i32>} : memref<128x128xf32, #tpu.memory_space<vmem>>, vector<128x128xf32>,
    return
  }
  func.func @transform_0(%arg0: i32) -> (i32, i32) {
    %c0_i32 = arith.constant 0 : i32
    %c0_i32_0 = arith.constant 0 : i32
    %c0_i32_1 = arith.constant 0 : i32
    return %c0_i32, %c0_i32_0 : i32, i32
  }
  func.func @transform_1(%arg0: i32) -> (i32, i32) {
    %c0_i32 = arith.constant 0 : i32
    %c0_i32_0 = arith.constant 0 : i32
    return %c0_i32, %arg0 : i32, i32
  }
  func.func @transform_2(%arg0: i32) -> (i32, i32) {
    %c0_i32 = arith.constant 0 : i32
    %c0_i32_0 = arith.constant 0 : i32
    return %c0_i32, %arg0 : i32, i32
  }
  func.func @transform_3(%arg0: i32) -> (i32, i32) {
    %c0_i32 = arith.constant 0 : i32
    %c0_i32_0 = arith.constant 0 : i32
    %c0_i32_1 = arith.constant 0 : i32
    return %c0_i32, %c0_i32_0 : i32, i32
  }
  func.func @transform_4(%arg0: i32) -> (i32, i32) {
    %c0_i32 = arith.constant 0 : i32
    %c0_i32_0 = arith.constant 0 : i32
    return %c0_i32, %arg0 : i32, i32
  }
}

</mosaic_0001>

<llo_original>
// kernel: tpu_custom_call.1
$region0: #{tpu_custom_call.1}
  #allocation0 [shape = 'u32[]', space=smem, size = 0x4, offset = 0x4, fixed_abs, tag = 'smem constant byte address 0x4 - core index']
  #allocation1 [shape = 'u32[144,128]{1,0:T(1,128)}', space=vmem, size = 0x12000, scoped, tag = 'internal scratch']
  #allocation2 [shape = 'f32[128,128]{1,0:T(8,128)}', space=vmem, size = 0x10000, scoped, tag = 'scratch operand']
  %s0 = inlined_call_operand.hbm [shape: f32[128,128], index: 0, kind: input, shape index: {}]
  %s1 = inlined_call_operand.hbm [shape: f32[128,384], index: 1, kind: input, shape index: {}]
  %s2 = inlined_call_operand.vmem [shape: f32[1,384], index: 2, kind: input, shape index: {}]
  %s3 = inlined_call_operand.hbm [shape: bf16[128,128], index: 3, kind: input, shape index: {}]
  %s4 = inlined_call_operand.hbm [shape: f32[128,384], index: 4, kind: output, shape index: {}]
  %s5 = sld [smem:[#allocation0]]
  $region61: #{tpu_custom_call.1} parent=0
    _
  %s7 = ssub.s32 1, %s5
  %s8 = scalar_select 0, %s7, %s5
  $region1: #{tpu_custom_call.1} parent=0
    #allocation3 [shape = 'u8[65536]{0}', space=vmem, size = 0x10000, scoped, tag = 'input window, operand 0, single buffered']
    #allocation4 [shape = 's32[2]{0}', space=sflag, size = 0x8, scoped, tag = 'scoped memory for tpu_custom_call.1']
    #allocation5 [shape = 's32[2]{0}', space=sflag, size = 0x8, scoped, tag = 'scoped memory for tpu_custom_call.1']
    #allocation6 [shape = 'u8[131072]{0}', space=vmem, size = 0x20000, scoped, tag = 'input window, operand 1']
    #allocation7 [shape = 's32[2]{0}', space=sflag, size = 0x8, scoped, tag = 'scoped memory for tpu_custom_call.1']
    #allocation8 [shape = 'u8[32768]{0}', space=vmem, size = 0x8000, scoped, tag = 'input window, operand 3, single buffered']
    #allocation9 [shape = 'u8[131072]{0}', space=vmem, size = 0x20000, scoped, tag = 'output window, operand 0']
    %9 = vsyncpa [#allocation4], 0
    %10 = vsyncpa [#allocation7], 0
    %s11 = scalar_lea.sflag [#allocation7], 1
    %12 = vsyncpa %s11, 0
    %13 = vsyncpa [#allocation5], 0
    %s14 = scalar_lea.sflag [#allocation5], 1
    %15 = vsyncpa %s14, 0
    loop: start=0, step=1, limit=5
    $region2: #{tpu_custom_call.1} parent=1 // loop_pre_header
      _
    $region3: #{tpu_custom_call.1} parent=1 // loop_header
      %s17 = sphi 0, %s21
      %p18 = scmp.ge.s32.totalorder %s17, 5
      %s25 = sphi 0, %s25
      %s27 = sphi 0, %s25
      %s28 = sphi 0, %s27
      %s42 = sphi 0, %s28
      %s48 = sphi 0, %s50
      %s51 = sphi 0, %s48
      %s52 = sphi 0, %s51
      %s68 = sphi 0, %s52
      %s74 = sphi 0, %s76
      %s77 = sphi 0, %s74
      %s78 = sphi 0, %s77
      %s94 = sphi 0, %s78
      %s98 = sphi 0, %s98
      %s100 = sphi 0, %s98
      %s101 = sphi 0, %s100
      %s115 = sphi 0, %s101
      %s121 = sphi 0, %s123
      %s124 = sphi 0, %s121
      %s125 = sphi 0, %s124
      %s141 = sphi 0, %s125
    $region4: #{tpu_custom_call.1} parent=1 // loop_header_branch
      %20 = sbr.rel (%p18) target = $region8
    $region5: #{tpu_custom_call.1} parent=1 // loop_body
      %s22 = ssub.s32 %s17, 1
      %s23 = ssub.s32 %s17, 2
      %s24 = sadd.s32 %s17, 1
      %s26 = sadd.s32 %s25, 1
      %p29 = scmp.eq.s32.totalorder %s17, 2
      %p30 = scmp.ne.s32.totalorder %s25, %s27
      %p31 = scmp.eq.s32.totalorder %s17, 0
      %p32 = por %p30, %p31
      %p33 = scmp.ne.s32.totalorder %s25, %s27
      %p34 = scmp.eq.s32.totalorder %s22, 2
      %p35 = por %p33, %p34
      %p36 = scmp.ne.s32.totalorder %s27, %s28
      %p37 = scmp.eq.s32.totalorder %s22, 0
      %p38 = por %p36, %p37
      %p39 = scmp.ne.s32.totalorder %s27, %s28
      %p40 = scmp.eq.s32.totalorder %s23, 2
      %p41 = por %p39, %p40
      %p43 = scmp.ne.s32.totalorder %s28, %s42
      %p44 = scmp.eq.s32.totalorder %s23, 0
      %p45 = por %p43, %p44
      %s46 = ssub.s32 %s17, %s24
      %p47 = scmp.eq.s32.totalorder %s46, 0
      %s49 = sadd.s32 %s48, 1
      %s50 = scalar_select %p47, %s48, %s49
      %p53 = pneg %p47
      %p54 = scmp.eq.s32.totalorder %s17, 2
      %p55 = por %p53, %p54
      %p56 = scmp.ne.s32.totalorder %s48, %s51
      %p57 = scmp.eq.s32.totalorder %s17, 0
      %p58 = por %p56, %p57
      %p59 = scmp.ne.s32.totalorder %s48, %s51
      %p60 = scmp.eq.s32.totalorder %s22, 2
      %p61 = por %p59, %p60
      %p62 = scmp.ne.s32.totalorder %s51, %s52
      %p63 = scmp.eq.s32.totalorder %s22, 0
      %p64 = por %p62, %p63
      %p65 = scmp.ne.s32.totalorder %s51, %s52
      %p66 = scmp.eq.s32.totalorder %s23, 2
      %p67 = por %p65, %p66
      %p69 = scmp.ne.s32.totalorder %s52, %s68
      %p70 = scmp.eq.s32.totalorder %s23, 0
      %p71 = por %p69, %p70
      %s72 = ssub.s32 %s17, %s24
      %p73 = scmp.eq.s32.totalorder %s72, 0
      %s75 = sadd.s32 %s74, 1
      %s76 = scalar_select %p73, %s74, %s75
      %p79 = pneg %p73
      %p80 = scmp.eq.s32.totalorder %s17, 2
      %p81 = por %p79, %p80
      %p82 = scmp.ne.s32.totalorder %s74, %s77
      %p83 = scmp.eq.s32.totalorder %s17, 0
      %p84 = por %p82, %p83
      %p85 = scmp.ne.s32.totalorder %s74, %s77
      %p86 = scmp.eq.s32.totalorder %s22, 2
      %p87 = por %p85, %p86
      %p88 = scmp.ne.s32.totalorder %s77, %s78
      %p89 = scmp.eq.s32.totalorder %s22, 0
      %p90 = por %p88, %p89
      %p91 = scmp.ne.s32.totalorder %s77, %s78
      %p92 = scmp.eq.s32.totalorder %s23, 2
      %p93 = por %p91, %p92
      %p95 = scmp.ne.s32.totalorder %s78, %s94
      %p96 = scmp.eq.s32.totalorder %s23, 0
      %p97 = por %p95, %p96
      %s99 = sadd.s32 %s98, 1
      %p102 = scmp.eq.s32.totalorder %s17, 2
      %p103 = scmp.ne.s32.totalorder %s98, %s100
      %p104 = scmp.eq.s32.totalorder %s17, 0
      %p105 = por %p103, %p104
      %p106 = scmp.ne.s32.totalorder %s98, %s100
      %p107 = scmp.eq.s32.totalorder %s22, 2
      %p108 = por %p106, %p107
      %p109 = scmp.ne.s32.totalorder %s100, %s101
      %p110 = scmp.eq.s32.totalorder %s22, 0
      %p111 = por %p109, %p110
      %p112 = scmp.ne.s32.totalorder %s100, %s101
      %p113 = scmp.eq.s32.totalorder %s23, 2
      %p114 = por %p112, %p113
      %p116 = scmp.ne.s32.totalorder %s101, %s115
      %p117 = scmp.eq.s32.totalorder %s23, 0
      %p118 = por %p116, %p117
      %s119 = ssub.s32 %s17, %s24
      %p120 = scmp.eq.s32.totalorder %s119, 0
      %s122 = sadd.s32 %s121, 1
      %s123 = scalar_select %p120, %s121, %s122
      %p126 = pneg %p120
      %p127 = scmp.eq.s32.totalorder %s17, 2
      %p128 = por %p126, %p127
      %p129 = scmp.ne.s32.totalorder %s121, %s124
      %p130 = scmp.eq.s32.totalorder %s17, 0
      %p131 = por %p129, %p130
      %p132 = scmp.ne.s32.totalorder %s121, %s124
      %p133 = scmp.eq.s32.totalorder %s22, 2
      %p134 = por %p132, %p133
      %p135 = scmp.ne.s32.totalorder %s124, %s125
      %p136 = scmp.eq.s32.totalorder %s22, 0
      %p137 = por %p135, %p136
      %p138 = scmp.ne.s32.totalorder %s124, %s125
      %p139 = scmp.eq.s32.totalorder %s23, 2
      %p140 = por %p138, %p139
      %p142 = scmp.ne.s32.totalorder %s125, %s141
      %p143 = scmp.eq.s32.totalorder %s23, 0
      %p144 = por %p142, %p143
      %p145 = scmp.le.s32.totalorder 1, %s17
      %p146 = scmp.lt.s32.totalorder %s17, 4
      %p147 = pnand %p145, %p146
      %p148 = pneg %p147
      // Predicated region
      $region9: #{tpu_custom_call.1} parent=5 // pred_check
        _
      $region10: #{tpu_custom_call.1} parent=5 // pred_check_branch
        %150 = sbr.rel (%p147) target = $region12
      $region11: #{tpu_custom_call.1} parent=5 // pred_region
        %s151 = ssub.s32 %s17, 1
        // Predicated region
        $region13: #{tpu_custom_call.1} parent=11 // pred_check
          %p152 = pneg %p38
        $region14: #{tpu_custom_call.1} parent=11 // pred_check_branch
          %154 = sbr.rel (%p152) target = $region16
        $region15: #{tpu_custom_call.1} parent=11 // pred_region
          %s156 = ssub.s32 2048, 2048
          %157 = vsyncadd [#allocation4], %s156
          %s158 = sshll.u32 [#allocation3], 4
          %s159 = int_to_ptr.vmem [resolvable:$true] %s158
          %164 = dma.hbm_to_vmem [thread:$0]  %s0, 2048, %s159, [#allocation4], 128, 128, 8
        $region16: #{tpu_custom_call.1} parent=11 // pred_fallthru
          _
        // Predicated region
        $region17: #{tpu_custom_call.1} parent=11 // pred_check
          %p165 = pneg %p111
        $region18: #{tpu_custom_call.1} parent=11 // pred_check_branch
          %167 = sbr.rel (%p165) target = $region20
        $region19: #{tpu_custom_call.1} parent=11 // pred_region
          %s169 = ssub.s32 1024, 1024
          %170 = vsyncadd [#allocation7], %s169
          %s171 = sshll.u32 [#allocation8], 4
          %s172 = int_to_ptr.vmem [resolvable:$true] %s171
          %177 = dma.hbm_to_vmem [thread:$0]  %s3, 1024, %s172, [#allocation7], 64, 64, 4
        $region20: #{tpu_custom_call.1} parent=11 // pred_fallthru
          _
      $region12: #{tpu_custom_call.1} parent=5 // pred_fallthru
        _
      %p178 = scmp.lt.s32.totalorder %s17, 3
      // Predicated region
      $region21: #{tpu_custom_call.1} parent=5 // pred_check
        %p179 = pneg %p178
      $region22: #{tpu_custom_call.1} parent=5 // pred_check_branch
        %181 = sbr.rel (%p179) target = $region24
      $region23: #{tpu_custom_call.1} parent=5 // pred_region
        // Predicated region
        $region25: #{tpu_custom_call.1} parent=23 // pred_check
          %p182 = pneg %p58
        $region26: #{tpu_custom_call.1} parent=23 // pred_check_branch
          %184 = sbr.rel (%p182) target = $region28
        $region27: #{tpu_custom_call.1} parent=23 // pred_region
          %s185 = sand.u32 %s17, 1
          %s186 = scalar_lea.sflag [#allocation7], %s185
          %s187 = sand.u32 %s48, 1
          %s188 = smul.addr %s187, 128
          %s189 = scalar_lea.vmem [#allocation6], %s188
          %s191 = ssub.s32 2048, 2048
          %192 = vsyncadd %s186, %s191
          %s193 = smul.addr %s17, 128
          %s194 = scalar_lea.hbm %s1, %s193
          %s195 = sshll.u32 %s189, 4
          %s196 = int_to_ptr.vmem [resolvable:$true] %s195
          %201 = dma.hbm_to_vmem [thread:$0]  %s194, 2048, %s196, %s186, 384, 128, 8
        $region28: #{tpu_custom_call.1} parent=23 // pred_fallthru
          _
        // Predicated region
        $region29: #{tpu_custom_call.1} parent=23 // pred_check
          %p202 = pneg %p84
        $region30: #{tpu_custom_call.1} parent=23 // pred_check_branch
          %204 = sbr.rel (%p202) target = $region32
        $region31: #{tpu_custom_call.1} parent=23 // pred_region
          %p205 = scmp.lt.s32.totalorder %s17, 2
          %s206 = scalar_select %p205, %s17, 2
          %s207 = scalar_lea.vmem %s2, %s206
        $region32: #{tpu_custom_call.1} parent=23 // pred_fallthru
          _
      $region24: #{tpu_custom_call.1} parent=5 // pred_fallthru
        _
      %p208 = scmp.le.s32.totalorder 1, %s17
      %p209 = scmp.lt.s32.totalorder %s17, 4
      %p210 = pnand %p208, %p209
      %p211 = pneg %p210
      // Predicated region
      $region33: #{tpu_custom_call.1} parent=5 // pred_check
        _
      $region34: #{tpu_custom_call.1} parent=5 // pred_check_branch
        %213 = sbr.rel (%p210) target = $region36
      $region35: #{tpu_custom_call.1} parent=5 // pred_region
        %s214 = ssub.s32 %s17, 1
        // Predicated region
        $region37: #{tpu_custom_call.1} parent=35 // pred_check
          %p215 = pneg %p38
        $region38: #{tpu_custom_call.1} parent=35 // pred_check_branch
          %217 = sbr.rel (%p215) target = $region40
        $region39: #{tpu_custom_call.1} parent=35 // pred_region
          %218 = dma.done [#allocation4], 2048
        $region40: #{tpu_custom_call.1} parent=35 // pred_fallthru
          _
        %s219 = sand.u32 %s22, 1
        %s220 = scalar_lea.sflag [#allocation7], %s219
        %s221 = sand.u32 %s51, 1
        %s222 = smul.addr %s221, 128
        %s223 = scalar_lea.vmem [#allocation6], %s222
        // Predicated region
        $region41: #{tpu_custom_call.1} parent=35 // pred_check
          %p224 = pneg %p64
        $region42: #{tpu_custom_call.1} parent=35 // pred_check_branch
          %226 = sbr.rel (%p224) target = $region44
        $region43: #{tpu_custom_call.1} parent=35 // pred_region
          %227 = dma.done %s220, 2048
        $region44: #{tpu_custom_call.1} parent=35 // pred_fallthru
          _
        // Predicated region
        $region45: #{tpu_custom_call.1} parent=35 // pred_check
          %p228 = pneg %p111
        $region46: #{tpu_custom_call.1} parent=35 // pred_check_branch
          %230 = sbr.rel (%p228) target = $region48
        $region47: #{tpu_custom_call.1} parent=35 // pred_region
          %231 = dma.done [#allocation7], 1024
        $region48: #{tpu_custom_call.1} parent=35 // pred_fallthru
          _
        %p232 = pneg %p38
        %p233 = pneg %p35
        %s234 = sand.u32 %s22, 1
        %s235 = scalar_lea.sflag [#allocation7], %s234
        %s236 = sand.u32 %s51, 1
        %s237 = smul.addr %s236, 128
        %s238 = scalar_lea.vmem [#allocation6], %s237
        %p239 = pneg %p64
        %p240 = pneg %p61
        %p241 = scmp.lt.s32.totalorder %s22, 2
        %s242 = scalar_select %p241, %s22, 2
        %s243 = scalar_lea.vmem %s2, %s242
        %p244 = pneg %p90
        %p245 = pneg %p87
        %p246 = pneg %p111
        %p247 = pneg %p108
        %p248 = pneg %p137
        %p249 = pneg %p134
        %s250 = sand.u32 %s124, 1
        %s251 = scalar_lea.sflag [#allocation5], %s250
        %s252 = sand.u32 %s124, 1
        %s253 = smul.addr %s252, 128
        %s254 = scalar_lea.vmem [#allocation9], %s253
        %p255 = scmp.lt.s32.totalorder %s22, 2
        %s256 = scalar_select %p255, %s22, 2
        %s257 = scalar_lea.vmem %s2, %s256
        %v259 = vld [vmem:[#allocation3] sm:$0xff]
        %v260 = vld [vmem:[#allocation3 + $0x8] sm:$0xff]
        %v261 = vld [vmem:[#allocation3 + $0x10] sm:$0xff]
        %v262 = vld [vmem:[#allocation3 + $0x18] sm:$0xff]
        %v263 = vld [vmem:[#allocation3 + $0x20] sm:$0xff]
        %v264 = vld [vmem:[#allocation3 + $0x28] sm:$0xff]
        %v265 = vld [vmem:[#allocation3 + $0x30] sm:$0xff]
        %v266 = vld [vmem:[#allocation3 + $0x38] sm:$0xff]
        %v267 = vld [vmem:[#allocation3 + $0x40] sm:$0xff]
        %v268 = vld [vmem:[#allocation3 + $0x48] sm:$0xff]
        %v269 = vld [vmem:[#allocation3 + $0x50] sm:$0xff]
        %v270 = vld [vmem:[#allocation3 + $0x58] sm:$0xff]
        %v271 = vld [vmem:[#allocation3 + $0x60] sm:$0xff]
        %v272 = vld [vmem:[#allocation3 + $0x68] sm:$0xff]
        %v273 = vld [vmem:[#allocation3 + $0x70] sm:$0xff]
        %v274 = vld [vmem:[#allocation3 + $0x78] sm:$0xff]
        %v275 = vld [vmem:[%s223] sm:$0xff]
        %v276 = vld [vmem:[%s223 + $0x8] sm:$0xff]
        %v277 = vld [vmem:[%s223 + $0x10] sm:$0xff]
        %v278 = vld [vmem:[%s223 + $0x18] sm:$0xff]
        %v279 = vld [vmem:[%s223 + $0x20] sm:$0xff]
        %v280 = vld [vmem:[%s223 + $0x28] sm:$0xff]
        %v281 = vld [vmem:[%s223 + $0x30] sm:$0xff]
        %v282 = vld [vmem:[%s223 + $0x38] sm:$0xff]
        %v283 = vld [vmem:[%s223 + $0x40] sm:$0xff]
        %v284 = vld [vmem:[%s223 + $0x48] sm:$0xff]
        %v285 = vld [vmem:[%s223 + $0x50] sm:$0xff]
        %v286 = vld [vmem:[%s223 + $0x58] sm:$0xff]
        %v287 = vld [vmem:[%s223 + $0x60] sm:$0xff]
        %v288 = vld [vmem:[%s223 + $0x68] sm:$0xff]
        %v289 = vld [vmem:[%s223 + $0x70] sm:$0xff]
        %v290 = vld [vmem:[%s223 + $0x78] sm:$0xff]
        %v291 = vld [vmem:[%s257] sm:$0x1]
        %v293 = vlaneseq
        %v294 = vshrl.u32 %v293, 7
        %v295 = vsub.s32 0, %v294
        %v296 = vrot.slane %v291, %v295
        %298 = vmatprep.subr.mxu0 0.0
        %299 = vmatpush1.msra.mxu0 %v275
        %300 = vmatprep.subr.mxu0 0.0
        %301 = vmatpush1.msra.mxu0 %v276
        %302 = vmatprep.subr.mxu0 0.0
        %303 = vmatpush1.msra.mxu0 %v277
        %304 = vmatprep.subr.mxu0 0.0
        %305 = vmatpush1.msra.mxu0 %v278
        %306 = vmatprep.subr.mxu0 0.0
        %307 = vmatpush1.msra.mxu0 %v279
        %308 = vmatprep.subr.mxu0 0.0
        %309 = vmatpush1.msra.mxu0 %v280
        %310 = vmatprep.subr.mxu0 0.0
        %311 = vmatpush1.msra.mxu0 %v281
        %312 = vmatprep.subr.mxu0 0.0
        %313 = vmatpush1.msra.mxu0 %v282
        %314 = vmatprep.subr.mxu0 0.0
        %315 = vmatpush1.msra.mxu0 %v283
        %316 = vmatprep.subr.mxu0 0.0
        %317 = vmatpush1.msra.mxu0 %v284
        %318 = vmatprep.subr.mxu0 0.0
        %319 = vmatpush1.msra.mxu0 %v285
        %320 = vmatprep.subr.mxu0 0.0
        %321 = vmatpush1.msra.mxu0 %v286
        %322 = vmatprep.subr.mxu0 0.0
        %323 = vmatpush1.msra.mxu0 %v287
        %324 = vmatprep.subr.mxu0 0.0
        %325 = vmatpush1.msra.mxu0 %v288
        %326 = vmatprep.subr.mxu0 0.0
        %327 = vmatpush1.msra.mxu0 %v289
        %328 = vmatprep.subr.mxu0 0.0
        %329 = vmatpush1.msra.mxu0 %v290
        %330 = vmatprep.subr.mxu0 0.0
        %331 = vmatpush1.msra.mxu0 0.0
        %332 = vmatprep.subr.mxu0 0.0
        %333 = vmatpush1.msra.mxu0 0.0
        %334 = vmatprep.subr.mxu0 0.0
        %335 = vmatpush1.msra.mxu0 0.0
        %336 = vmatprep.subr.mxu0 0.0
        %337 = vmatpush1.msra.mxu0 0.0
        %338 = vmatprep.subr.mxu0 0.0
        %339 = vmatpush1.msra.mxu0 0.0
        %340 = vmatprep.subr.mxu0 0.0
        %341 = vmatpush1.msra.mxu0 0.0
        %342 = vmatprep.subr.mxu0 0.0
        %343 = vmatpush1.msra.mxu0 0.0
        %344 = vmatprep.subr.mxu0 0.0
        %345 = vmatpush1.msra.mxu0 0.0
        %346 = vmatprep.subr.mxu0 0.0
        %347 = vmatpush1.msra.mxu0 0.0
        %348 = vmatprep.subr.mxu0 0.0
        %349 = vmatpush1.msra.mxu0 0.0
        %350 = vmatprep.subr.mxu0 0.0
        %351 = vmatpush1.msra.mxu0 0.0
        %352 = vmatprep.subr.mxu0 0.0
        %353 = vmatpush1.msra.mxu0 0.0
        %354 = vmatprep.subr.mxu0 0.0
        %355 = vmatpush1.msra.mxu0 0.0
        %356 = vmatprep.subr.mxu0 0.0
        %357 = vmatpush1.msra.mxu0 0.0
        %358 = vmatprep.subr.mxu0 0.0
        %359 = vmatpush1.msra.mxu0 0.0
        %360 = vmatprep.subr.mxu0 0.0
        %361 = vmatpush1.msra.mxu0 0.0
        %362 = vmatprep.mubr.f32.mxu0 0.0
        %363 = vmatmul.mubr.f32.gmra.mrb[0].mxu0 %v259
        %v364 = vpop.f32.mrb[0].mxu0
        %v365 = vadd.f32 %v296, %v364
        %v366 = vpop.f32.mrb[0].mxu0
        %367 = vmatprep.mubr.f32.mxu0 0.0
        %368 = vmatmul.mubr.f32.gmra.mrb[0].mxu0 %v260
        %v369 = vpop.f32.mrb[0].mxu0
        %v370 = vadd.f32 %v296, %v369
        %v371 = vpop.f32.mrb[0].mxu0
        %372 = vmatprep.mubr.f32.mxu0 0.0
        %373 = vmatmul.mubr.f32.gmra.mrb[0].mxu0 %v261
        %v374 = vpop.f32.mrb[0].mxu0
        %v375 = vadd.f32 %v296, %v374
        %v376 = vpop.f32.mrb[0].mxu0
        %377 = vmatprep.mubr.f32.mxu0 0.0
        %378 = vmatmul.mubr.f32.gmra.mrb[0].mxu0 %v262
        %v379 = vpop.f32.mrb[0].mxu0
        %v380 = vadd.f32 %v296, %v379
        %v381 = vpop.f32.mrb[0].mxu0
        %382 = vmatprep.mubr.f32.mxu0 0.0
        %383 = vmatmul.mubr.f32.gmra.mrb[0].mxu0 %v263
        %v384 = vpop.f32.mrb[0].mxu0
        %v385 = vadd.f32 %v296, %v384
        %v386 = vpop.f32.mrb[0].mxu0
        %387 = vmatprep.mubr.f32.mxu0 0.0
        %388 = vmatmul.mubr.f32.gmra.mrb[0].mxu0 %v264
        %v389 = vpop.f32.mrb[0].mxu0
        %v390 = vadd.f32 %v296, %v389
        %v391 = vpop.f32.mrb[0].mxu0
        %392 = vmatprep.mubr.f32.mxu0 0.0
        %393 = vmatmul.mubr.f32.gmra.mrb[0].mxu0 %v265
        %v394 = vpop.f32.mrb[0].mxu0
        %v395 = vadd.f32 %v296, %v394
        %v396 = vpop.f32.mrb[0].mxu0
        %397 = vmatprep.mubr.f32.mxu0 0.0
        %398 = vmatmul.mubr.f32.gmra.mrb[0].mxu0 %v266
        %v399 = vpop.f32.mrb[0].mxu0
        %v400 = vadd.f32 %v296, %v399
        %v401 = vpop.f32.mrb[0].mxu0
        %402 = vmatprep.mubr.f32.mxu0 0.0
        %403 = vmatmul.mubr.f32.gmra.mrb[0].mxu0 %v267
        %v404 = vpop.f32.mrb[0].mxu0
        %v405 = vadd.f32 %v296, %v404
        %v406 = vpop.f32.mrb[0].mxu0
        %407 = vmatprep.mubr.f32.mxu0 0.0
        %408 = vmatmul.mubr.f32.gmra.mrb[0].mxu0 %v268
        %v409 = vpop.f32.mrb[0].mxu0
        %v410 = vadd.f32 %v296, %v409
        %v411 = vpop.f32.mrb[0].mxu0
        %412 = vmatprep.mubr.f32.mxu0 0.0
        %413 = vmatmul.mubr.f32.gmra.mrb[0].mxu0 %v269
        %v414 = vpop.f32.mrb[0].mxu0
        %v415 = vadd.f32 %v296, %v414
        %v416 = vpop.f32.mrb[0].mxu0
        %417 = vmatprep.mubr.f32.mxu0 0.0
        %418 = vmatmul.mubr.f32.gmra.mrb[0].mxu0 %v270
        %v419 = vpop.f32.mrb[0].mxu0
        %v420 = vadd.f32 %v296, %v419
        %v421 = vpop.f32.mrb[0].mxu0
        %422 = vmatprep.mubr.f32.mxu0 0.0
        %423 = vmatmul.mubr.f32.gmra.mrb[0].mxu0 %v271
        %v424 = vpop.f32.mrb[0].mxu0
        %v425 = vadd.f32 %v296, %v424
        %v426 = vpop.f32.mrb[0].mxu0
        %427 = vmatprep.mubr.f32.mxu0 0.0
        %428 = vmatmul.mubr.f32.gmra.mrb[0].mxu0 %v272
        %v429 = vpop.f32.mrb[0].mxu0
        %v430 = vadd.f32 %v296, %v429
        %v431 = vpop.f32.mrb[0].mxu0
        %432 = vmatprep.mubr.f32.mxu0 0.0
        %433 = vmatmul.mubr.f32.gmra.mrb[0].mxu0 %v273
        %v434 = vpop.f32.mrb[0].mxu0
        %v435 = vadd.f32 %v296, %v434
        %v436 = vpop.f32.mrb[0].mxu0
        %437 = vmatprep.mubr.f32.mxu0 0.0
        %438 = vmatmul.mubr.f32.gmra.mrb[0].mxu0 %v274
        %v439 = vpop.f32.mrb[0].mxu0
        %v440 = vadd.f32 %v296, %v439
        %v441 = vpop.f32.mrb[0].mxu0
        %442 = vdwg.mxu0
        %v443 = vmax.f32 %v365, 0.0
        %v444 = vmax.f32 %v370, 0.0
        %v445 = vmax.f32 %v375, 0.0
        %v446 = vmax.f32 %v380, 0.0
        %v447 = vmax.f32 %v385, 0.0
        %v448 = vmax.f32 %v390, 0.0
        %v449 = vmax.f32 %v395, 0.0
        %v450 = vmax.f32 %v400, 0.0
        %v451 = vmax.f32 %v405, 0.0
        %v452 = vmax.f32 %v410, 0.0
        %v453 = vmax.f32 %v415, 0.0
        %v454 = vmax.f32 %v420, 0.0
        %v455 = vmax.f32 %v425, 0.0
        %v456 = vmax.f32 %v430, 0.0
        %v457 = vmax.f32 %v435, 0.0
        %v458 = vmax.f32 %v440, 0.0
        %v459 = vlaneseq
        %v460 = vshrl.u32 %v459, 7
        %v461 = vadd.s32 %v460, 8
        %v462 = vadd.s32 %v460, 16
        %v463 = vadd.s32 %v460, 24
        %v464 = vadd.s32 %v460, 32
        %v465 = vadd.s32 %v460, 40
        %v466 = vadd.s32 %v460, 48
        %v467 = vadd.s32 %v460, 56
        %v468 = vadd.s32 %v460, 64
        %v469 = vadd.s32 %v460, 72
        %v470 = vadd.s32 %v460, 80
        %v471 = vadd.s32 %v460, 88
        %v472 = vadd.s32 %v460, 96
        %v473 = vadd.s32 %v460, 104
        %v474 = vadd.s32 %v460, 112
        %v475 = vadd.s32 %v460, 120
        %vm476 = vcmp.lt.s32.totalorder %v460, 120
        %vm477 = vcmp.lt.s32.totalorder %v461, 120
        %vm478 = vcmp.lt.s32.totalorder %v462, 120
        %vm479 = vcmp.lt.s32.totalorder %v463, 120
        %vm480 = vcmp.lt.s32.totalorder %v464, 120
        %vm481 = vcmp.lt.s32.totalorder %v465, 120
        %vm482 = vcmp.lt.s32.totalorder %v466, 120
        %vm483 = vcmp.lt.s32.totalorder %v467, 120
        %vm484 = vcmp.lt.s32.totalorder %v468, 120
        %vm485 = vcmp.lt.s32.totalorder %v469, 120
        %vm486 = vcmp.lt.s32.totalorder %v470, 120
        %vm487 = vcmp.lt.s32.totalorder %v471, 120
        %vm488 = vcmp.lt.s32.totalorder %v472, 120
        %vm489 = vcmp.lt.s32.totalorder %v473, 120
        %vm490 = vcmp.lt.s32.totalorder %v474, 120
        %vm491 = vcmp.lt.s32.totalorder %v475, 120
        %v492 = vsel %vm476, %v443, 0.0
        %v493 = vsel %vm477, %v444, 0.0
        %v494 = vsel %vm478, %v445, 0.0
        %v495 = vsel %vm479, %v446, 0.0
        %v496 = vsel %vm480, %v447, 0.0
        %v497 = vsel %vm481, %v448, 0.0
        %v498 = vsel %vm482, %v449, 0.0
        %v499 = vsel %vm483, %v450, 0.0
        %v500 = vsel %vm484, %v451, 0.0
        %v501 = vsel %vm485, %v452, 0.0
        %v502 = vsel %vm486, %v453, 0.0
        %v503 = vsel %vm487, %v454, 0.0
        %v504 = vsel %vm488, %v455, 0.0
        %v505 = vsel %vm489, %v456, 0.0
        %v506 = vsel %vm490, %v457, 0.0
        %v507 = vsel %vm491, %v458, 0.0
        %508 = vst [vmem:[%s254] sm:$0xff] %v492
        %509 = vst [vmem:[%s254 + $0x8] sm:$0xff] %v493
        %510 = vst [vmem:[%s254 + $0x10] sm:$0xff] %v494
        %511 = vst [vmem:[%s254 + $0x18] sm:$0xff] %v495
        %512 = vst [vmem:[%s254 + $0x20] sm:$0xff] %v496
        %513 = vst [vmem:[%s254 + $0x28] sm:$0xff] %v497
        %514 = vst [vmem:[%s254 + $0x30] sm:$0xff] %v498
        %515 = vst [vmem:[%s254 + $0x38] sm:$0xff] %v499
        %516 = vst [vmem:[%s254 + $0x40] sm:$0xff] %v500
        %517 = vst [vmem:[%s254 + $0x48] sm:$0xff] %v501
        %518 = vst [vmem:[%s254 + $0x50] sm:$0xff] %v502
        %519 = vst [vmem:[%s254 + $0x58] sm:$0xff] %v503
        %520 = vst [vmem:[%s254 + $0x60] sm:$0xff] %v504
        %521 = vst [vmem:[%s254 + $0x68] sm:$0xff] %v505
        %522 = vst [vmem:[%s254 + $0x70] sm:$0xff] %v506
        %523 = vst [vmem:[%s254 + $0x78] sm:$0xff] %v507
        %v524 = vld [vmem:[#allocation8] sm:$0xf]
        %v525 = vld [vmem:[#allocation8 + $0x4] sm:$0xf]
        %v526 = vld [vmem:[#allocation8 + $0x8] sm:$0xf]
        %v527 = vld [vmem:[#allocation8 + $0xc] sm:$0xf]
        %v528 = vld [vmem:[#allocation8 + $0x10] sm:$0xf]
        %v529 = vld [vmem:[#allocation8 + $0x14] sm:$0xf]
        %v530 = vld [vmem:[#allocation8 + $0x18] sm:$0xf]
        %v531 = vld [vmem:[#allocation8 + $0x1c] sm:$0xf]
        %v532 = vld [vmem:[#allocation8 + $0x20] sm:$0xf]
        %v533 = vld [vmem:[#allocation8 + $0x24] sm:$0xf]
        %v534 = vld [vmem:[#allocation8 + $0x28] sm:$0xf]
        %v535 = vld [vmem:[#allocation8 + $0x2c] sm:$0xf]
        %v536 = vld [vmem:[#allocation8 + $0x30] sm:$0xf]
        %v537 = vld [vmem:[#allocation8 + $0x34] sm:$0xf]
        %v538 = vld [vmem:[#allocation8 + $0x38] sm:$0xf]
        %v539 = vld [vmem:[#allocation8 + $0x3c] sm:$0xf]
        %v540 = vld [vmem:[%s254] sm:$0xff]
        %v541 = vld [vmem:[%s254 + $0x8] sm:$0xff]
        %v542 = vld [vmem:[%s254 + $0x10] sm:$0xff]
        %v543 = vld [vmem:[%s254 + $0x18] sm:$0xff]
        %v544 = vld [vmem:[%s254 + $0x20] sm:$0xff]
        %v545 = vld [vmem:[%s254 + $0x28] sm:$0xff]
        %v546 = vld [vmem:[%s254 + $0x30] sm:$0xff]
        %v547 = vld [vmem:[%s254 + $0x38] sm:$0xff]
        %v548 = vld [vmem:[%s254 + $0x40] sm:$0xff]
        %v549 = vld [vmem:[%s254 + $0x48] sm:$0xff]
        %v550 = vld [vmem:[%s254 + $0x50] sm:$0xff]
        %v551 = vld [vmem:[%s254 + $0x58] sm:$0xff]
        %v552 = vld [vmem:[%s254 + $0x60] sm:$0xff]
        %v553 = vld [vmem:[%s254 + $0x68] sm:$0xff]
        %v554 = vld [vmem:[%s254 + $0x70] sm:$0xff]
        %v555 = vld [vmem:[%s254 + $0x78] sm:$0xff]
        %v556 = vpack.c.bf16 %v541, %v540
        %v557 = vpack.c.bf16 %v543, %v542
        %v558 = vpack.c.bf16 %v545, %v544
        %v559 = vpack.c.bf16 %v547, %v546
        %v560 = vpack.c.bf16 %v549, %v548
        %v561 = vpack.c.bf16 %v551, %v550
        %v562 = vpack.c.bf16 %v553, %v552
        %v563 = vpack.c.bf16 %v555, %v554
        %v580 = vunpack.c.l.b16 %v524
        %v581 = vunpack.c.l.b16 %v525
        %v582 = vunpack.c.l.b16 %v526
        %v583 = vunpack.c.l.b16 %v527
        %v584 = vunpack.c.l.b16 %v528
        %v585 = vunpack.c.l.b16 %v529
        %v586 = vunpack.c.l.b16 %v530
        %v587 = vunpack.c.l.b16 %v531
        %v588 = vunpack.c.l.b16 %v532
        %v589 = vunpack.c.l.b16 %v533
        %v590 = vunpack.c.l.b16 %v534
        %v591 = vunpack.c.l.b16 %v535
        %v592 = vunpack.c.l.b16 %v536
        %v593 = vunpack.c.l.b16 %v537
        %v594 = vunpack.c.l.b16 %v538
        %v595 = vunpack.c.l.b16 %v539
        %v596 = vpack.c.b16 %v581, %v580
        %v597 = vpack.c.b16 %v583, %v582
        %v598 = vpack.c.b16 %v585, %v584
        %v599 = vpack.c.b16 %v587, %v586
        %v600 = vpack.c.b16 %v589, %v588
        %v601 = vpack.c.b16 %v591, %v590
        %v602 = vpack.c.b16 %v593, %v592
        %v603 = vpack.c.b16 %v595, %v594
        %612 = vmatprep.subr.bf16.mxu0 0
        %613 = vmatpush1.bf16.msra.mxu0 %v556
        %614 = vmatprep.subr.bf16.mxu0 0
        %615 = vmatpush1.bf16.msra.mxu0 %v557
        %616 = vmatprep.subr.bf16.mxu0 0
        %617 = vmatpush1.bf16.msra.mxu0 %v558
        %618 = vmatprep.subr.bf16.mxu0 0
        %619 = vmatpush1.bf16.msra.mxu0 %v559
        %620 = vmatprep.subr.bf16.mxu0 0
        %621 = vmatpush1.bf16.msra.mxu0 %v560
        %622 = vmatprep.subr.bf16.mxu0 0
        %623 = vmatpush1.bf16.msra.mxu0 %v561
        %624 = vmatprep.subr.bf16.mxu0 0
        %625 = vmatpush1.bf16.msra.mxu0 %v562
        %626 = vmatprep.subr.bf16.mxu0 0
        %627 = vmatpush1.bf16.msra.mxu0 %v563
        %628 = vmatprep.subr.bf16.mxu0 0
        %629 = vmatpush1.bf16.msra.mxu0 0
        %630 = vmatprep.subr.bf16.mxu0 0
        %631 = vmatpush1.bf16.msra.mxu0 0
        %632 = vmatprep.subr.bf16.mxu0 0
        %633 = vmatpush1.bf16.msra.mxu0 0
        %634 = vmatprep.subr.bf16.mxu0 0
        %635 = vmatpush1.bf16.msra.mxu0 0
        %636 = vmatprep.subr.bf16.mxu0 0
        %637 = vmatpush1.bf16.msra.mxu0 0
        %638 = vmatprep.subr.bf16.mxu0 0
        %639 = vmatpush1.bf16.msra.mxu0 0
        %640 = vmatprep.subr.bf16.mxu0 0
        %641 = vmatpush1.bf16.msra.mxu0 0
        %642 = vmatprep.subr.bf16.mxu0 0
        %643 = vmatpush1.bf16.msra.mxu0 0
        %644 = vmatprep.mubr.bf16.mxu0 0
        %645 = vmatmul.mubr.bf16.gmra.mrb[0].mxu0 %v596
        %v646 = vpop.f32.mrb[0].mxu0
        %v647 = vadd.f32 0.0, %v646
        %v648 = vpop.f32.mrb[0].mxu0
        %v649 = vpop.f32.mrb[0].mxu0
        %v650 = vadd.f32 0.0, %v649
        %v651 = vpop.f32.mrb[0].mxu0
        %652 = vmatprep.mubr.bf16.mxu0 0
        %653 = vmatmul.mubr.bf16.gmra.mrb[0].mxu0 %v597
        %v654 = vpop.f32.mrb[0].mxu0
        %v655 = vadd.f32 0.0, %v654
        %v656 = vpop.f32.mrb[0].mxu0
        %v657 = vpop.f32.mrb[0].mxu0
        %v658 = vadd.f32 0.0, %v657
        %v659 = vpop.f32.mrb[0].mxu0
        %660 = vmatprep.mubr.bf16.mxu0 0
        %661 = vmatmul.mubr.bf16.gmra.mrb[0].mxu0 %v598
        %v662 = vpop.f32.mrb[0].mxu0
        %v663 = vadd.f32 0.0, %v662
        %v664 = vpop.f32.mrb[0].mxu0
        %v665 = vpop.f32.mrb[0].mxu0
        %v666 = vadd.f32 0.0, %v665
        %v667 = vpop.f32.mrb[0].mxu0
        %668 = vmatprep.mubr.bf16.mxu0 0
        %669 = vmatmul.mubr.bf16.gmra.mrb[0].mxu0 %v599
        %v670 = vpop.f32.mrb[0].mxu0
        %v671 = vadd.f32 0.0, %v670
        %v672 = vpop.f32.mrb[0].mxu0
        %v673 = vpop.f32.mrb[0].mxu0
        %v674 = vadd.f32 0.0, %v673
        %v675 = vpop.f32.mrb[0].mxu0
        %676 = vmatprep.mubr.bf16.mxu0 0
        %677 = vmatmul.mubr.bf16.gmra.mrb[0].mxu0 %v600
        %v678 = vpop.f32.mrb[0].mxu0
        %v679 = vadd.f32 0.0, %v678
        %v680 = vpop.f32.mrb[0].mxu0
        %v681 = vpop.f32.mrb[0].mxu0
        %v682 = vadd.f32 0.0, %v681
        %v683 = vpop.f32.mrb[0].mxu0
        %684 = vmatprep.mubr.bf16.mxu0 0
        %685 = vmatmul.mubr.bf16.gmra.mrb[0].mxu0 %v601
        %v686 = vpop.f32.mrb[0].mxu0
        %v687 = vadd.f32 0.0, %v686
        %v688 = vpop.f32.mrb[0].mxu0
        %v689 = vpop.f32.mrb[0].mxu0
        %v690 = vadd.f32 0.0, %v689
        %v691 = vpop.f32.mrb[0].mxu0
        %692 = vmatprep.mubr.bf16.mxu0 0
        %693 = vmatmul.mubr.bf16.gmra.mrb[0].mxu0 %v602
        %v694 = vpop.f32.mrb[0].mxu0
        %v695 = vadd.f32 0.0, %v694
        %v696 = vpop.f32.mrb[0].mxu0
        %v697 = vpop.f32.mrb[0].mxu0
        %v698 = vadd.f32 0.0, %v697
        %v699 = vpop.f32.mrb[0].mxu0
        %700 = vmatprep.mubr.bf16.mxu0 0
        %701 = vmatmul.mubr.bf16.gmra.mrb[0].mxu0 %v603
        %v702 = vpop.f32.mrb[0].mxu0
        %v703 = vadd.f32 0.0, %v702
        %v704 = vpop.f32.mrb[0].mxu0
        %v705 = vpop.f32.mrb[0].mxu0
        %v706 = vadd.f32 0.0, %v705
        %v707 = vpop.f32.mrb[0].mxu0
        %708 = vdwg.mxu0
        %709 = vst [vmem:[#allocation2] sm:$0xff] %v647
        %710 = vst [vmem:[#allocation2 + $0x8] sm:$0xff] %v650
        %711 = vst [vmem:[#allocation2 + $0x10] sm:$0xff] %v655
        %712 = vst [vmem:[#allocation2 + $0x18] sm:$0xff] %v658
        %713 = vst [vmem:[#allocation2 + $0x20] sm:$0xff] %v663
        %714 = vst [vmem:[#allocation2 + $0x28] sm:$0xff] %v666
        %715 = vst [vmem:[#allocation2 + $0x30] sm:$0xff] %v671
        %716 = vst [vmem:[#allocation2 + $0x38] sm:$0xff] %v674
        %717 = vst [vmem:[#allocation2 + $0x40] sm:$0xff] %v679
        %718 = vst [vmem:[#allocation2 + $0x48] sm:$0xff] %v682
        %719 = vst [vmem:[#allocation2 + $0x50] sm:$0xff] %v687
        %720 = vst [vmem:[#allocation2 + $0x58] sm:$0xff] %v690
        %721 = vst [vmem:[#allocation2 + $0x60] sm:$0xff] %v695
        %722 = vst [vmem:[#allocation2 + $0x68] sm:$0xff] %v698
        %723 = vst [vmem:[#allocation2 + $0x70] sm:$0xff] %v703
        %724 = vst [vmem:[#allocation2 + $0x78] sm:$0xff] %v706
        %v725 = vld [vmem:[#allocation8] sm:$0xf]
        %v726 = vld [vmem:[#allocation8 + $0x4] sm:$0xf]
        %v727 = vld [vmem:[#allocation8 + $0x8] sm:$0xf]
        %v728 = vld [vmem:[#allocation8 + $0xc] sm:$0xf]
        %v729 = vld [vmem:[#allocation8 + $0x10] sm:$0xf]
        %v730 = vld [vmem:[#allocation8 + $0x14] sm:$0xf]
        %v731 = vld [vmem:[#allocation8 + $0x18] sm:$0xf]
        %v732 = vld [vmem:[#allocation8 + $0x1c] sm:$0xf]
        %v733 = vld [vmem:[#allocation8 + $0x20] sm:$0xf]
        %v734 = vld [vmem:[#allocation8 + $0x24] sm:$0xf]
        %v735 = vld [vmem:[#allocation8 + $0x28] sm:$0xf]
        %v736 = vld [vmem:[#allocation8 + $0x2c] sm:$0xf]
        %v737 = vld [vmem:[#allocation8 + $0x30] sm:$0xf]
        %v738 = vld [vmem:[#allocation8 + $0x34] sm:$0xf]
        %v739 = vld [vmem:[#allocation8 + $0x38] sm:$0xf]
        %v740 = vld [vmem:[#allocation8 + $0x3c] sm:$0xf]
        %v741 = vld [vmem:[#allocation2] sm:$0xff]
        %v742 = vld [vmem:[#allocation2 + $0x8] sm:$0xff]
        %v743 = vld [vmem:[#allocation2 + $0x10] sm:$0xff]
        %v744 = vld [vmem:[#allocation2 + $0x18] sm:$0xff]
        %v745 = vld [vmem:[#allocation2 + $0x20] sm:$0xff]
        %v746 = vld [vmem:[#allocation2 + $0x28] sm:$0xff]
        %v747 = vld [vmem:[#allocation2 + $0x30] sm:$0xff]
        %v748 = vld [vmem:[#allocation2 + $0x38] sm:$0xff]
        %v749 = vld [vmem:[#allocation2 + $0x40] sm:$0xff]
        %v750 = vld [vmem:[#allocation2 + $0x48] sm:$0xff]
        %v751 = vld [vmem:[#allocation2 + $0x50] sm:$0xff]
        %v752 = vld [vmem:[#allocation2 + $0x58] sm:$0xff]
        %v753 = vld [vmem:[#allocation2 + $0x60] sm:$0xff]
        %v754 = vld [vmem:[#allocation2 + $0x68] sm:$0xff]
        %v755 = vld [vmem:[#allocation2 + $0x70] sm:$0xff]
        %v756 = vld [vmem:[#allocation2 + $0x78] sm:$0xff]
        %v757 = vpack.c.bf16 %v742, %v741
        %v758 = vpack.c.bf16 %v744, %v743
        %v759 = vpack.c.bf16 %v746, %v745
        %v760 = vpack.c.bf16 %v748, %v747
        %v761 = vpack.c.bf16 %v750, %v749
        %v762 = vpack.c.bf16 %v752, %v751
        %v763 = vpack.c.bf16 %v754, %v753
        %v764 = vpack.c.bf16 %v756, %v755
        %v781 = vunpack.c.l.b16 %v725
        %v782 = vunpack.c.l.b16 %v726
        %v783 = vunpack.c.l.b16 %v727
        %v784 = vunpack.c.l.b16 %v728
        %v785 = vunpack.c.l.b16 %v729
        %v786 = vunpack.c.l.b16 %v730
        %v787 = vunpack.c.l.b16 %v731
        %v788 = vunpack.c.l.b16 %v732
        %v789 = vunpack.c.l.b16 %v733
        %v790 = vunpack.c.l.b16 %v734
        %v791 = vunpack.c.l.b16 %v735
        %v792 = vunpack.c.l.b16 %v736
        %v793 = vunpack.c.l.b16 %v737
        %v794 = vunpack.c.l.b16 %v738
        %v795 = vunpack.c.l.b16 %v739
        %v796 = vunpack.c.l.b16 %v740
        %v797 = vpack.c.b16 %v782, %v781
        %v798 = vpack.c.b16 %v784, %v783
        %v799 = vpack.c.b16 %v786, %v785
        %v800 = vpack.c.b16 %v788, %v787
        %v801 = vpack.c.b16 %v790, %v789
        %v802 = vpack.c.b16 %v792, %v791
        %v803 = vpack.c.b16 %v794, %v793
        %v804 = vpack.c.b16 %v796, %v795
        %813 = vmatprep.subr.bf16.mxu0 0
        %814 = vmatpush1.bf16.msra.mxu0 %v757
        %815 = vmatprep.subr.bf16.mxu0 0
        %816 = vmatpush1.bf16.msra.mxu0 %v758
        %817 = vmatprep.subr.bf16.mxu0 0
        %818 = vmatpush1.bf16.msra.mxu0 %v759
        %819 = vmatprep.subr.bf16.mxu0 0
        %820 = vmatpush1.bf16.msra.mxu0 %v760
        %821 = vmatprep.subr.bf16.mxu0 0
        %822 = vmatpush1.bf16.msra.mxu0 %v761
        %823 = vmatprep.subr.bf16.mxu0 0
        %824 = vmatpush1.bf16.msra.mxu0 %v762
        %825 = vmatprep.subr.bf16.mxu0 0
        %826 = vmatpush1.bf16.msra.mxu0 %v763
        %827 = vmatprep.subr.bf16.mxu0 0
        %828 = vmatpush1.bf16.msra.mxu0 %v764
        %829 = vmatprep.subr.bf16.mxu0 0
        %830 = vmatpush1.bf16.msra.mxu0 0
        %831 = vmatprep.subr.bf16.mxu0 0
        %832 = vmatpush1.bf16.msra.mxu0 0
        %833 = vmatprep.subr.bf16.mxu0 0
        %834 = vmatpush1.bf16.msra.mxu0 0
        %835 = vmatprep.subr.bf16.mxu0 0
        %836 = vmatpush1.bf16.msra.mxu0 0
        %837 = vmatprep.subr.bf16.mxu0 0
        %838 = vmatpush1.bf16.msra.mxu0 0
        %839 = vmatprep.subr.bf16.mxu0 0
        %840 = vmatpush1.bf16.msra.mxu0 0
        %841 = vmatprep.subr.bf16.mxu0 0
        %842 = vmatpush1.bf16.msra.mxu0 0
        %843 = vmatprep.subr.bf16.mxu0 0
        %844 = vmatpush1.bf16.msra.mxu0 0
        %845 = vmatprep.mubr.bf16.mxu0 0
        %846 = vmatmul.mubr.bf16.gmra.mrb[0].mxu0 %v797
        %v847 = vpop.f32.mrb[0].mxu0
        %v848 = vadd.f32 0.0, %v847
        %v849 = vpop.f32.mrb[0].mxu0
        %v850 = vpop.f32.mrb[0].mxu0
        %v851 = vadd.f32 0.0, %v850
        %v852 = vpop.f32.mrb[0].mxu0
        %853 = vmatprep.mubr.bf16.mxu0 0
        %854 = vmatmul.mubr.bf16.gmra.mrb[0].mxu0 %v798
        %v855 = vpop.f32.mrb[0].mxu0
        %v856 = vadd.f32 0.0, %v855
        %v857 = vpop.f32.mrb[0].mxu0
        %v858 = vpop.f32.mrb[0].mxu0
        %v859 = vadd.f32 0.0, %v858
        %v860 = vpop.f32.mrb[0].mxu0
        %861 = vmatprep.mubr.bf16.mxu0 0
        %862 = vmatmul.mubr.bf16.gmra.mrb[0].mxu0 %v799
        %v863 = vpop.f32.mrb[0].mxu0
        %v864 = vadd.f32 0.0, %v863
        %v865 = vpop.f32.mrb[0].mxu0
        %v866 = vpop.f32.mrb[0].mxu0
        %v867 = vadd.f32 0.0, %v866
        %v868 = vpop.f32.mrb[0].mxu0
        %869 = vmatprep.mubr.bf16.mxu0 0
        %870 = vmatmul.mubr.bf16.gmra.mrb[0].mxu0 %v800
        %v871 = vpop.f32.mrb[0].mxu0
        %v872 = vadd.f32 0.0, %v871
        %v873 = vpop.f32.mrb[0].mxu0
        %v874 = vpop.f32.mrb[0].mxu0
        %v875 = vadd.f32 0.0, %v874
        %v876 = vpop.f32.mrb[0].mxu0
        %877 = vmatprep.mubr.bf16.mxu0 0
        %878 = vmatmul.mubr.bf16.gmra.mrb[0].mxu0 %v801
        %v879 = vpop.f32.mrb[0].mxu0
        %v880 = vadd.f32 0.0, %v879
        %v881 = vpop.f32.mrb[0].mxu0
        %v882 = vpop.f32.mrb[0].mxu0
        %v883 = vadd.f32 0.0, %v882
        %v884 = vpop.f32.mrb[0].mxu0
        %885 = vmatprep.mubr.bf16.mxu0 0
        %886 = vmatmul.mubr.bf16.gmra.mrb[0].mxu0 %v802
        %v887 = vpop.f32.mrb[0].mxu0
        %v888 = vadd.f32 0.0, %v887
        %v889 = vpop.f32.mrb[0].mxu0
        %v890 = vpop.f32.mrb[0].mxu0
        %v891 = vadd.f32 0.0, %v890
        %v892 = vpop.f32.mrb[0].mxu0
        %893 = vmatprep.mubr.bf16.mxu0 0
        %894 = vmatmul.mubr.bf16.gmra.mrb[0].mxu0 %v803
        %v895 = vpop.f32.mrb[0].mxu0
        %v896 = vadd.f32 0.0, %v895
        %v897 = vpop.f32.mrb[0].mxu0
        %v898 = vpop.f32.mrb[0].mxu0
        %v899 = vadd.f32 0.0, %v898
        %v900 = vpop.f32.mrb[0].mxu0
        %901 = vmatprep.mubr.bf16.mxu0 0
        %902 = vmatmul.mubr.bf16.gmra.mrb[0].mxu0 %v804
        %v903 = vpop.f32.mrb[0].mxu0
        %v904 = vadd.f32 0.0, %v903
        %v905 = vpop.f32.mrb[0].mxu0
        %v906 = vpop.f32.mrb[0].mxu0
        %v907 = vadd.f32 0.0, %v906
        %v908 = vpop.f32.mrb[0].mxu0
        %909 = vdwg.mxu0
        %910 = vst [vmem:[%s254] sm:$0xff] %v848
        %911 = vst [vmem:[%s254 + $0x8] sm:$0xff] %v851
        %912 = vst [vmem:[%s254 + $0x10] sm:$0xff] %v856
        %913 = vst [vmem:[%s254 + $0x18] sm:$0xff] %v859
        %914 = vst [vmem:[%s254 + $0x20] sm:$0xff] %v864
        %915 = vst [vmem:[%s254 + $0x28] sm:$0xff] %v867
        %916 = vst [vmem:[%s254 + $0x30] sm:$0xff] %v872
        %917 = vst [vmem:[%s254 + $0x38] sm:$0xff] %v875
        %918 = vst [vmem:[%s254 + $0x40] sm:$0xff] %v880
        %919 = vst [vmem:[%s254 + $0x48] sm:$0xff] %v883
        %920 = vst [vmem:[%s254 + $0x50] sm:$0xff] %v888
        %921 = vst [vmem:[%s254 + $0x58] sm:$0xff] %v891
        %922 = vst [vmem:[%s254 + $0x60] sm:$0xff] %v896
        %923 = vst [vmem:[%s254 + $0x68] sm:$0xff] %v899
        %924 = vst [vmem:[%s254 + $0x70] sm:$0xff] %v904
        %925 = vst [vmem:[%s254 + $0x78] sm:$0xff] %v907
        %s926 = sand.u32 %s124, 1
        %s927 = scalar_lea.sflag [#allocation5], %s926
        %s928 = sand.u32 %s124, 1
        %s929 = smul.addr %s928, 128
        %s930 = scalar_lea.vmem [#allocation9], %s929
        // Predicated region
        $region49: #{tpu_custom_call.1} parent=35 // pred_check
          %p931 = pneg %p134
        $region50: #{tpu_custom_call.1} parent=35 // pred_check_branch
          %933 = sbr.rel (%p931) target = $region52
        $region51: #{tpu_custom_call.1} parent=35 // pred_region
          %s935 = ssub.s32 2048, 2048
          %936 = vsyncadd %s927, %s935
          %s937 = smul.addr %s22, 128
          %s938 = scalar_lea.hbm %s4, %s937
          %s939 = sshll.u32 %s930, 4
          %s940 = int_to_ptr.vmem [resolvable:$true] %s939
          %945 = dma.vmem_to_hbm [thread:$0]  %s940, 2048, %s938, %s927, 128, 384, 8
        $region52: #{tpu_custom_call.1} parent=35 // pred_fallthru
          _
      $region36: #{tpu_custom_call.1} parent=5 // pred_fallthru
        _
      %p946 = scmp.le.s32.totalorder 2, %s17
      // Predicated region
      $region53: #{tpu_custom_call.1} parent=5 // pred_check
        %p947 = pneg %p946
      $region54: #{tpu_custom_call.1} parent=5 // pred_check_branch
        %949 = sbr.rel (%p947) target = $region56
      $region55: #{tpu_custom_call.1} parent=5 // pred_region
        %s950 = ssub.s32 %s17, 2
        // Predicated region
        $region57: #{tpu_custom_call.1} parent=55 // pred_check
          %p951 = pneg %p140
        $region58: #{tpu_custom_call.1} parent=55 // pred_check_branch
          %953 = sbr.rel (%p951) target = $region60
        $region59: #{tpu_custom_call.1} parent=55 // pred_region
          %s954 = sand.u32 %s125, 1
          %s955 = scalar_lea.sflag [#allocation5], %s954
          %s956 = sand.u32 %s125, 1
          %s957 = smul.addr %s956, 128
          %s958 = scalar_lea.vmem [#allocation9], %s957
          %959 = dma.done %s955, 2048
        $region60: #{tpu_custom_call.1} parent=55 // pred_fallthru
          _
      $region56: #{tpu_custom_call.1} parent=5 // pred_fallthru
        _
    $region6: #{tpu_custom_call.1} parent=1 // loop_footer
      %s21 = sadd.s32 1, %s17
    $region7: #{tpu_custom_call.1} parent=1 // loop_footer_branch
      %16 = sbr.rel target = $region3
    $region8: #{tpu_custom_call.1} parent=1 // loop_exit
      _
    %960 = vsyncpa [#allocation4], 1
    %s961 = scalar_lea.sflag [#allocation4], 1
    %962 = vsyncpa %s961, 1
    %963 = vsyncpa [#allocation7], 1
    %s964 = scalar_lea.sflag [#allocation7], 1
    %965 = vsyncpa %s964, 1
    %966 = vsyncpa [#allocation5], 1
    %s967 = scalar_lea.sflag [#allocation5], 1
    %968 = vsyncpa %s967, 1

</llo_original>
